<compile_context>
chip_gen: v7x
topology: tpu7x:2x2x1
jax: 0.10.0
libtpu: 0.0.40
codegen_flags: <defaults>
</compile_context>

<pallas_src>
import functools
import math

import jax
import jax.numpy as jnp
from jax.experimental import pallas as pl
from jax.experimental.pallas import tpu as pltpu


# --------------------------- in-kernel helpers ---------------------------
def _erf(x):
    # Abramowitz & Stegun 7.1.26 rational approximation of erf.  The approx
    # EUP reciprocal adds ~1e-3 relative error on top of the ~1.5e-7 formula
    # error; acceptable given bf16 MXU inputs elsewhere (well inside 3e-2).
    a1, a2, a3, a4, a5 = 0.254829592, -0.284496736, 1.421413741, -1.453152027, 1.061405429
    p = 0.3275911
    sgn = jnp.sign(x)
    ax = jnp.abs(x)
    t = pl.reciprocal(1.0 + p * ax, approx=True)          # EUP slot, frees VALU
    poly = ((((a5 * t + a4) * t + a3) * t + a2) * t + a1) * t
    return sgn * (1.0 - poly * jnp.exp(-ax * ax))


def _gelu_exact(x):
    # torch.nn.GELU() default (erf-based GELU)
    return 0.5 * x * (1.0 + _erf(x * (1.0 / math.sqrt(2.0))))


def _layer_norm(y, w, b, eps):
    mu = jnp.mean(y, axis=-1, keepdims=True)
    var = jnp.mean((y - mu) ** 2, axis=-1, keepdims=True)  # biased var (torch)
    return (y - mu) * jax.lax.rsqrt(var + eps) * w + b


# ------------- kernel 1: fused QKV projection, head-major outputs -------------
def _qkv_kernel(x_ref, wqkv_ref, bqkv_ref, q_ref, kt_ref, v_ref, *,
                num_heads, head_size):
    x = x_ref[0].astype(jnp.bfloat16)                                   # (TS, H)
    y = jnp.dot(x, wqkv_ref[...], preferred_element_type=jnp.float32) + bqkv_ref[...]
    h_all = num_heads * head_size
    # Per-head static lane slices + 2D transposes (simple, robustly lowered
    # ops) — cost hidden under the MXU matmul above.
    for h in range(num_heads):
        lo = h * head_size
        q_ref[0, h] = y[:, lo:lo + head_size].astype(q_ref.dtype)                    # (TS, d)
        kt_ref[0, h] = y[:, h_all + lo:h_all + lo + head_size].T.astype(kt_ref.dtype)  # (d, TS)
        v_ref[0, h] = y[:, 2 * h_all + lo:2 * h_all + lo + head_size].astype(v_ref.dtype)


# ------ kernel 2: attention + dense + LN1 + MLP + LN2 (per query tile) ------
def _attn_mlp_kernel(x_ref, q_ref, kt_ref, v_ref, mask_ref,
                     wad_ref, bad_ref, ln1w_ref, ln1b_ref,
                     wi_ref, bi_ref, wo_ref, bo_ref, ln2w_ref, ln2b_ref,
                     o_ref, *, eps):
    x = x_ref[0]                  # (TQ, H)    f32 residual stream
    q = q_ref[0]                  # (NH, TQ, d) bf16 (already scaled by 1/sqrt(d))
    kt = kt_ref[0]                # (NH, d,  S) bf16 (pre-transposed, lane-dense on S)
    v = v_ref[0]                  # (NH, S,  d) bf16
    mask = mask_ref[0, 0]         # (1, S)      f32 additive mask

    # scores: batched plain matmul over heads (no in-kernel K transpose)
    s = jnp.einsum('hqd,hds->hqs', q, kt, preferred_element_type=jnp.float32) + mask
    s = s - jnp.max(s, axis=-1, keepdims=True)
    e = jnp.exp(s)
    # exact normalizer: reciprocal of a tiny (NH,TQ,1) tensor, negligible cost
    probs = e * (1.0 / jnp.sum(e, axis=-1, keepdims=True))
    # attention dropout = identity (eval)
    ctx = jnp.einsum('hqs,hsd->hqd', probs.astype(jnp.bfloat16), v,
                     preferred_element_type=jnp.float32)                # (NH, TQ, d)

    # merge heads (lane concatenate) and do ONE K=H MXU-dense output projection
    nh = ctx.shape[0]
    ctx_m = jnp.concatenate([ctx[h] for h in range(nh)], axis=-1).astype(jnp.bfloat16)
    attn = jnp.dot(ctx_m, wad_ref[...], preferred_element_type=jnp.float32) + bad_ref[...]

    h1 = _layer_norm(x + attn, ln1w_ref[...], ln1b_ref[...], eps)

    inter = jnp.dot(h1.astype(jnp.bfloat16), wi_ref[...],
                    preferred_element_type=jnp.float32) + bi_ref[...]
    inter = _gelu_exact(inter)
    out = jnp.dot(inter.astype(jnp.bfloat16), wo_ref[...],
                  preferred_element_type=jnp.float32) + bo_ref[...]
    o_ref[0] = _layer_norm(h1 + out, ln2w_ref[...], ln2b_ref[...], eps).astype(o_ref.dtype)


# ------------------------------ host helpers ------------------------------
def _tpu_vmem_capacity_bytes():
    try:
        return int(pltpu.get_tpu_info().vmem_capacity_bytes)
    except Exception:
        return 64 * 1024 * 1024   # conservative fallback (v7x per-TC size)


def _seq_tile(s, target):
    """Sequence tile: full S if small, else the largest multiple of 128 <= target
    that divides S (multiple of 128 keeps the K^T output block lane-dense).
    Falls back to the full sequence."""
    if s <= target:
        return s
    t = (target // 128) * 128
    while t >= 128:
        if s % t == 0:
            return t
        t -= 128
    return s


def prepare_gpt2_params(params, num_heads):
    """One-time weight preprocessing (concat / 1/sqrt(d) fold / dtype casts).
    Keep this out of the per-forward path so the casts and concats don't run
    (and re-read all weights from HBM) on every call."""
    H = params["wq"].shape[0]
    d = H // num_heads
    scale = 1.0 / math.sqrt(d)
    bf16, f32 = jnp.bfloat16, jnp.float32
    wqkv = jnp.concatenate(
        [params["wq"] * scale, params["wk"], params["wv"]], axis=1).astype(bf16)
    bqkv = jnp.concatenate(
        [params["bq"] * scale, params["bk"], params["bv"]], axis=1).astype(f32)
    return dict(
        wqkv=wqkv, bqkv=bqkv,
        wad=params["wad"].astype(bf16), bad=params["bad"].astype(f32),
        ln1w=params["ln1w"].astype(f32), ln1b=params["ln1b"].astype(f32),
        wi=params["wi"].astype(bf16), bi=params["bi"].astype(f32),
        wo=params["wo"].astype(bf16), bo=params["bo"].astype(f32),
        ln2w=params["ln2w"].astype(f32), ln2b=params["ln2b"].astype(f32),
    )


def gpt2_layer(x, attention_mask, prep, *, num_heads, eps=1e-5, q_tile=None):
    """x: (B,S,H) f32 residual stream; attention_mask: additive mask broadcastable
    to (B,1,1,S); prep: output of prepare_gpt2_params.  Note: Q/K/V and all MXU
    inputs are bf16 (f32 accumulation)."""
    B, S, H = x.shape
    d = H // num_heads
    bf16, f32 = jnp.bfloat16, jnp.float32

    # generation-dependent tiling / VMEM budget (v7x: 64 MiB, v5e/v6e: 128 MiB)
    vmem_cap = _tpu_vmem_capacity_bytes()
    vmem_limit = max(32 * 1024 * 1024, int(vmem_cap * 0.85))   # leave scratch headroom
    if q_tile is None:
        q_tile = 256 if vmem_cap >= 96 * 1024 * 1024 else 128
    ts = _seq_tile(S, q_tile)

    def vmem_spec():
        # whole array resident in VMEM, constant across the grid (no re-DMA,
        # no per-step double buffering).
        return pl.BlockSpec(memory_space=pltpu.MemorySpace.VMEM)

    cparams = pltpu.CompilerParams(
        dimension_semantics=("parallel", "parallel"),
        vmem_limit_bytes=vmem_limit)

    # ---- kernel 1: fused QKV projection, emits head-major Q / K^T / V ----
    q, kt, v = pl.pallas_call(
        functools.partial(_qkv_kernel, num_heads=num_heads, head_size=d),
        out_shape=(jax.ShapeDtypeStruct((B, num_heads, S, d), bf16),   # Q
                   jax.ShapeDtypeStruct((B, num_heads, d, S), bf16),   # K^T
                   jax.ShapeDtypeStruct((B, num_heads, S, d), bf16)),  # V
        grid=(B, S // ts),
        in_specs=[pl.BlockSpec((1, ts, H), lambda b, i: (b, i, 0)),
                  vmem_spec(), vmem_spec()],
        out_specs=(pl.BlockSpec((1, num_heads, ts, d), lambda b, i: (b, 0, i, 0)),
                   pl.BlockSpec((1, num_heads, d, ts), lambda b, i: (b, 0, 0, i)),
                   pl.BlockSpec((1, num_heads, ts, d), lambda b, i: (b, 0, i, 0))),
        compiler_params=cparams,
    )(x, prep["wqkv"], prep["bqkv"])

    # additive mask, normalized to (B,1,1,S) so the batch-indexed BlockSpec is safe
    mask = jnp.broadcast_to(attention_mask.astype(f32), (B, 1, 1, S))

    # ---- kernel 2: attention + dense + LN1 + MLP + LN2 ----
    weights = [prep[k] for k in ("wad", "bad", "ln1w", "ln1b",
                                 "wi", "bi", "wo", "bo", "ln2w", "ln2b")]

    return pl.pallas_call(
        functools.partial(_attn_mlp_kernel, eps=eps),
        out_shape=jax.ShapeDtypeStruct((B, S, H), x.dtype),
        grid=(B, S // ts),
        in_specs=[
            pl.BlockSpec((1, ts, H), lambda b, i: (b, i, 0)),                 # x (residual)
            pl.BlockSpec((1, num_heads, ts, d), lambda b, i: (b, 0, i, 0)),   # Q tile
            pl.BlockSpec((1, num_heads, d, S), lambda b, i: (b, 0, 0, 0)),    # K^T (full seq)
            pl.BlockSpec((1, num_heads, S, d), lambda b, i: (b, 0, 0, 0)),    # V (full seq)
            pl.BlockSpec((1, 1, 1, S), lambda b, i: (b, 0, 0, 0)),            # additive mask
        ] + [vmem_spec() for _ in weights],
        out_specs=pl.BlockSpec((1, ts, H), lambda b, i: (b, i, 0)),
        compiler_params=cparams,
    )(x, q, kt, v, mask, *weights)


# ---------------- pure-JAX reference (f32) for validation ----------------
def _reference(x, mask, params, num_heads, eps):
    B, S, H = x.shape
    d = H // num_heads

    def lin(t, w, b):
        return t @ w + b

    def heads(t):
        return t.reshape(B, S, num_heads, d).transpose(0, 2, 1, 3)

    q = heads(lin(x, params["wq"], params["bq"]))
    k = heads(lin(x, params["wk"], params["bk"]))
    v = heads(lin(x, params["wv"], params["bv"]))
    s = q @ jnp.swapaxes(k, -1, -2) / math.sqrt(d) + mask
    p = jax.nn.softmax(s, axis=-1)
    ctx = (p @ v).transpose(0, 2, 1, 3).reshape(B, S, H)
    attn = lin(ctx, params["wad"], params["bad"])

    def ln(y, w, b):
        mu = y.mean(-1, keepdims=True)
        var = ((y - mu) ** 2).mean(-1, keepdims=True)
        return (y - mu) * jax.lax.rsqrt(var + eps) * w + b

    h1 = ln(x + attn, params["ln1w"], params["ln1b"])
    inter = jax.nn.gelu(lin(h1, params["wi"], params["bi"]), approximate=False)
    out = lin(inter, params["wo"], params["bo"])
    return ln(h1 + out, params["ln2w"], params["ln2b"])


if __name__ == "__main__":
    # small GPT2-like config (batch, seq, hidden, heads, intermediate)
    B, S, H, NH, I = 2, 8, 32, 4, 128
    key = jax.random.PRNGKey(0)
    ks = jax.random.split(key, 16)

    x = jax.random.normal(ks[0], (B, S, H), jnp.float32)

    # additive attention mask (B, 1, 1, S): mask out the last 2 keys of batch 1
    pad = jnp.zeros((B, S), jnp.float32).at[1, 6:].set(1.0)
    attention_mask = (pad * -10000.0).reshape(B, 1, 1, S)

    def lin_init(k, fan_in, fan_out):
        kw, kb = jax.random.split(k)
        w = 0.02 * jax.random.normal(kw, (fan_in, fan_out), jnp.float32)
        b = 0.02 * jax.random.normal(kb, (1, fan_out), jnp.float32)
        return w, b

    wq, bq = lin_init(ks[1], H, H)
    wk, bk = lin_init(ks[2], H, H)
    wv, bv = lin_init(ks[3], H, H)
    wad, bad = lin_init(ks[4], H, H)
    wi, bi = lin_init(ks[5], H, I)
    wo, bo = lin_init(ks[6], I, H)

    params = dict(
        wq=wq, bq=bq, wk=wk, bk=bk, wv=wv, bv=bv, wad=wad, bad=bad,
        ln1w=jnp.ones((1, H), jnp.float32), ln1b=jnp.zeros((1, H), jnp.float32),
        wi=wi, bi=bi, wo=wo, bo=bo,
        ln2w=jnp.ones((1, H), jnp.float32), ln2b=jnp.zeros((1, H), jnp.float32),
    )

    prep = prepare_gpt2_params(params, num_heads=NH)     # one-time weight prep
    out = gpt2_layer(x, attention_mask, prep, num_heads=NH, eps=1e-5)
    jax.block_until_ready(out)

    ref = _reference(x, attention_mask, params, NH, 1e-5)
    assert out.shape == (B, S, H) and bool(jnp.all(jnp.isfinite(out)))
    # bf16 MXU inputs (and bf16 Q/K/V) with f32 accumulation -> loose tolerance
    assert bool(jnp.allclose(out, ref, atol=3e-2, rtol=3e-2)), \
        float(jnp.max(jnp.abs(out - ref)))
    print("KERNEL_OK")
</pallas_src>

<mosaic_0001>
module attributes {stable_mosaic.version = 11 : i64} {
  func.func @_qkv_kernel(%arg0: i32, %arg1: i32, %arg2: memref<1x8x32xf32, #tpu.memory_space<vmem>>, %arg3: memref<32x96xbf16, #tpu.memory_space<vmem>>, %arg4: memref<1x96xf32, #tpu.memory_space<vmem>>, %arg5: memref<1x4x8x8xbf16, #tpu.memory_space<vmem>>, %arg6: memref<1x4x8x8xbf16, #tpu.memory_space<vmem>>, %arg7: memref<1x4x8x8xbf16, #tpu.memory_space<vmem>>) attributes {dimension_semantics = [#tpu.dimension_semantics<parallel>, #tpu.dimension_semantics<parallel>], iteration_bounds = array<i64: 2, 1>, scalar_prefetch = 0 : i64, scratch_operands = 0 : i64, tpu.core_type = #tpu.core_type<tc>, window_params = [{transform_indices = @transform_0, window_bounds = array<i64: 1, 8, 32>}, {pipeline_mode = #tpu.pipeline_mode<synchronous>, transform_indices = @transform_1, window_bounds = array<i64: 32, 96>}, {pipeline_mode = #tpu.pipeline_mode<synchronous>, transform_indices = @transform_2, window_bounds = array<i64: 1, 96>}, {transform_indices = @transform_3, window_bounds = array<i64: 1, 4, 8, 8>}, {transform_indices = @transform_4, window_bounds = array<i64: 1, 4, 8, 8>}, {transform_indices = @transform_5, window_bounds = array<i64: 1, 4, 8, 8>}]} {
    %c0 = arith.constant 0 : index
    %c0_0 = arith.constant 0 : index
    %c0_1 = arith.constant 0 : index
    %0 = vector.load %arg2[%c0, %c0_0, %c0_1] : memref<1x8x32xf32, #tpu.memory_space<vmem>>, vector<1x8x32xf32>
    %1 = vector.shape_cast %0 : vector<1x8x32xf32> to vector<8x32xf32>
    %2 = arith.truncf %1 : vector<8x32xf32> to vector<8x32xbf16>
    %c0_2 = arith.constant 0 : index
    %c0_3 = arith.constant 0 : index
    %3 = vector.load %arg3[%c0_2, %c0_3] : memref<32x96xbf16, #tpu.memory_space<vmem>>, vector<32x96xbf16>
    %cst = arith.constant dense<0.000000e+00> : vector<8x96xf32>
    %4 = tpu.matmul %2, %3, %cst {dimension_numbers = #tpu.dot_dimension_numbers<[1], [0], [0], [1], [0, 0, 1, 1], [], []>} : vector<8x32xbf16>, vector<32x96xbf16>, vector<8x96xf32> -> vector<8x96xf32>
    %c0_4 = arith.constant 0 : index
    %c0_5 = arith.constant 0 : index
    %5 = vector.load %arg4[%c0_4, %c0_5] : memref<1x96xf32, #tpu.memory_space<vmem>>, vector<1x96xf32>
    %6 = vector.broadcast %5 : vector<1x96xf32> to vector<8x96xf32>
    %7 = arith.addf %4, %6 : vector<8x96xf32>
    %8 = vector.extract_strided_slice %7 {offsets = [0, 0], sizes = [8, 8], strides = [1, 1]} : vector<8x96xf32> to vector<8x8xf32>
    %9 = arith.truncf %8 : vector<8x8xf32> to vector<8x8xbf16>
    %c0_6 = arith.constant 0 : index
    %c0_7 = arith.constant 0 : index
    %c0_8 = arith.constant 0 : index
    %c0_9 = arith.constant 0 : index
    %10 = vector.load %arg5[%c0_6, %c0_7, %c0_8, %c0_9] : memref<1x4x8x8xbf16, #tpu.memory_space<vmem>>, vector<1x1x8x8xbf16>
    %11 = vector.shape_cast %10 : vector<1x1x8x8xbf16> to vector<8x8xbf16>
    %12 = vector.shape_cast %9 : vector<8x8xbf16> to vector<1x1x8x8xbf16>
    tpu.vector_store %arg5[%c0_6, %c0_7, %c0_8, %c0_9], %12 {strides = array<i32>} : memref<1x4x8x8xbf16, #tpu.memory_space<vmem>>, vector<1x1x8x8xbf16>,
    %13 = vector.extract_strided_slice %7 {offsets = [0, 32], sizes = [8, 8], strides = [1, 1]} : vector<8x96xf32> to vector<8x8xf32>
    %14 = tpu.transpose %13, [1, 0] : vector<8x8xf32> -> vector<8x8xf32>
    %15 = arith.truncf %14 : vector<8x8xf32> to vector<8x8xbf16>
    %c0_10 = arith.constant 0 : index
    %c0_11 = arith.constant 0 : index
    %c0_12 = arith.constant 0 : index
    %c0_13 = arith.constant 0 : index
    %16 = vector.load %arg6[%c0_10, %c0_11, %c0_12, %c0_13] : memref<1x4x8x8xbf16, #tpu.memory_space<vmem>>, vector<1x1x8x8xbf16>
    %17 = vector.shape_cast %16 : vector<1x1x8x8xbf16> to vector<8x8xbf16>
    %18 = vector.shape_cast %15 : vector<8x8xbf16> to vector<1x1x8x8xbf16>
    tpu.vector_store %arg6[%c0_10, %c0_11, %c0_12, %c0_13], %18 {strides = array<i32>} : memref<1x4x8x8xbf16, #tpu.memory_space<vmem>>, vector<1x1x8x8xbf16>,
    %19 = vector.extract_strided_slice %7 {offsets = [0, 64], sizes = [8, 8], strides = [1, 1]} : vector<8x96xf32> to vector<8x8xf32>
    %20 = arith.truncf %19 : vector<8x8xf32> to vector<8x8xbf16>
    %c0_14 = arith.constant 0 : index
    %c0_15 = arith.constant 0 : index
    %c0_16 = arith.constant 0 : index
    %c0_17 = arith.constant 0 : index
    %21 = vector.load %arg7[%c0_14, %c0_15, %c0_16, %c0_17] : memref<1x4x8x8xbf16, #tpu.memory_space<vmem>>, vector<1x1x8x8xbf16>
    %22 = vector.shape_cast %21 : vector<1x1x8x8xbf16> to vector<8x8xbf16>
    %23 = vector.shape_cast %20 : vector<8x8xbf16> to vector<1x1x8x8xbf16>
    tpu.vector_store %arg7[%c0_14, %c0_15, %c0_16, %c0_17], %23 {strides = array<i32>} : memref<1x4x8x8xbf16, #tpu.memory_space<vmem>>, vector<1x1x8x8xbf16>,
    %24 = vector.extract_strided_slice %7 {offsets = [0, 8], sizes = [8, 8], strides = [1, 1]} : vector<8x96xf32> to vector<8x8xf32>
    %25 = arith.truncf %24 : vector<8x8xf32> to vector<8x8xbf16>
    %c0_18 = arith.constant 0 : index
    %c1 = arith.constant 1 : index
    %c0_19 = arith.constant 0 : index
    %c0_20 = arith.constant 0 : index
    %26 = vector.load %arg5[%c0_18, %c1, %c0_19, %c0_20] : memref<1x4x8x8xbf16, #tpu.memory_space<vmem>>, vector<1x1x8x8xbf16>
    %27 = vector.shape_cast %26 : vector<1x1x8x8xbf16> to vector<8x8xbf16>
    %28 = vector.shape_cast %25 : vector<8x8xbf16> to vector<1x1x8x8xbf16>
    tpu.vector_store %arg5[%c0_18, %c1, %c0_19, %c0_20], %28 {strides = array<i32>} : memref<1x4x8x8xbf16, #tpu.memory_space<vmem>>, vector<1x1x8x8xbf16>,
    %29 = vector.extract_strided_slice %7 {offsets = [0, 40], sizes = [8, 8], strides = [1, 1]} : vector<8x96xf32> to vector<8x8xf32>
    %30 = tpu.transpose %29, [1, 0] : vector<8x8xf32> -> vector<8x8xf32>
    %31 = arith.truncf %30 : vector<8x8xf32> to vector<8x8xbf16>
    %c0_21 = arith.constant 0 : index
    %c1_22 = arith.constant 1 : index
    %c0_23 = arith.constant 0 : index
    %c0_24 = arith.constant 0 : index
    %32 = vector.load %arg6[%c0_21, %c1_22, %c0_23, %c0_24] : memref<1x4x8x8xbf16, #tpu.memory_space<vmem>>, vector<1x1x8x8xbf16>
    %33 = vector.shape_cast %32 : vector<1x1x8x8xbf16> to vector<8x8xbf16>
    %34 = vector.shape_cast %31 : vector<8x8xbf16> to vector<1x1x8x8xbf16>
    tpu.vector_store %arg6[%c0_21, %c1_22, %c0_23, %c0_24], %34 {strides = array<i32>} : memref<1x4x8x8xbf16, #tpu.memory_space<vmem>>, vector<1x1x8x8xbf16>,
    %35 = vector.extract_strided_slice %7 {offsets = [0, 72], sizes = [8, 8], strides = [1, 1]} : vector<8x96xf32> to vector<8x8xf32>
    %36 = arith.truncf %35 : vector<8x8xf32> to vector<8x8xbf16>
    %c0_25 = arith.constant 0 : index
    %c1_26 = arith.constant 1 : index
    %c0_27 = arith.constant 0 : index
    %c0_28 = arith.constant 0 : index
    %37 = vector.load %arg7[%c0_25, %c1_26, %c0_27, %c0_28] : memref<1x4x8x8xbf16, #tpu.memory_space<vmem>>, vector<1x1x8x8xbf16>
    %38 = vector.shape_cast %37 : vector<1x1x8x8xbf16> to vector<8x8xbf16>
    %39 = vector.shape_cast %36 : vector<8x8xbf16> to vector<1x1x8x8xbf16>
    tpu.vector_store %arg7[%c0_25, %c1_26, %c0_27, %c0_28], %39 {strides = array<i32>} : memref<1x4x8x8xbf16, #tpu.memory_space<vmem>>, vector<1x1x8x8xbf16>,
    %40 = vector.extract_strided_slice %7 {offsets = [0, 16], sizes = [8, 8], strides = [1, 1]} : vector<8x96xf32> to vector<8x8xf32>
    %41 = arith.truncf %40 : vector<8x8xf32> to vector<8x8xbf16>
    %c0_29 = arith.constant 0 : index
    %c2 = arith.constant 2 : index
    %c0_30 = arith.constant 0 : index
    %c0_31 = arith.constant 0 : index
    %42 = vector.load %arg5[%c0_29, %c2, %c0_30, %c0_31] : memref<1x4x8x8xbf16, #tpu.memory_space<vmem>>, vector<1x1x8x8xbf16>
    %43 = vector.shape_cast %42 : vector<1x1x8x8xbf16> to vector<8x8xbf16>
    %44 = vector.shape_cast %41 : vector<8x8xbf16> to vector<1x1x8x8xbf16>
    tpu.vector_store %arg5[%c0_29, %c2, %c0_30, %c0_31], %44 {strides = array<i32>} : memref<1x4x8x8xbf16, #tpu.memory_space<vmem>>, vector<1x1x8x8xbf16>,
    %45 = vector.extract_strided_slice %7 {offsets = [0, 48], sizes = [8, 8], strides = [1, 1]} : vector<8x96xf32> to vector<8x8xf32>
    %46 = tpu.transpose %45, [1, 0] : vector<8x8xf32> -> vector<8x8xf32>
    %47 = arith.truncf %46 : vector<8x8xf32> to vector<8x8xbf16>
    %c0_32 = arith.constant 0 : index
    %c2_33 = arith.constant 2 : index
    %c0_34 = arith.constant 0 : index
    %c0_35 = arith.constant 0 : index
    %48 = vector.load %arg6[%c0_32, %c2_33, %c0_34, %c0_35] : memref<1x4x8x8xbf16, #tpu.memory_space<vmem>>, vector<1x1x8x8xbf16>
    %49 = vector.shape_cast %48 : vector<1x1x8x8xbf16> to vector<8x8xbf16>
    %50 = vector.shape_cast %47 : vector<8x8xbf16> to vector<1x1x8x8xbf16>
    tpu.vector_store %arg6[%c0_32, %c2_33, %c0_34, %c0_35], %50 {strides = array<i32>} : memref<1x4x8x8xbf16, #tpu.memory_space<vmem>>, vector<1x1x8x8xbf16>,
    %51 = vector.extract_strided_slice %7 {offsets = [0, 80], sizes = [8, 8], strides = [1, 1]} : vector<8x96xf32> to vector<8x8xf32>
    %52 = arith.truncf %51 : vector<8x8xf32> to vector<8x8xbf16>
    %c0_36 = arith.constant 0 : index
    %c2_37 = arith.constant 2 : index
    %c0_38 = arith.constant 0 : index
    %c0_39 = arith.constant 0 : index
    %53 = vector.load %arg7[%c0_36, %c2_37, %c0_38, %c0_39] : memref<1x4x8x8xbf16, #tpu.memory_space<vmem>>, vector<1x1x8x8xbf16>
    %54 = vector.shape_cast %53 : vector<1x1x8x8xbf16> to vector<8x8xbf16>
    %55 = vector.shape_cast %52 : vector<8x8xbf16> to vector<1x1x8x8xbf16>
    tpu.vector_store %arg7[%c0_36, %c2_37, %c0_38, %c0_39], %55 {strides = array<i32>} : memref<1x4x8x8xbf16, #tpu.memory_space<vmem>>, vector<1x1x8x8xbf16>,
    %56 = vector.extract_strided_slice %7 {offsets = [0, 24], sizes = [8, 8], strides = [1, 1]} : vector<8x96xf32> to vector<8x8xf32>
    %57 = arith.truncf %56 : vector<8x8xf32> to vector<8x8xbf16>
    %c0_40 = arith.constant 0 : index
    %c3 = arith.constant 3 : index
    %c0_41 = arith.constant 0 : index
    %c0_42 = arith.constant 0 : index
    %58 = vector.load %arg5[%c0_40, %c3, %c0_41, %c0_42] : memref<1x4x8x8xbf16, #tpu.memory_space<vmem>>, vector<1x1x8x8xbf16>
    %59 = vector.shape_cast %58 : vector<1x1x8x8xbf16> to vector<8x8xbf16>
    %60 = vector.shape_cast %57 : vector<8x8xbf16> to vector<1x1x8x8xbf16>
    tpu.vector_store %arg5[%c0_40, %c3, %c0_41, %c0_42], %60 {strides = array<i32>} : memref<1x4x8x8xbf16, #tpu.memory_space<vmem>>, vector<1x1x8x8xbf16>,
    %61 = vector.extract_strided_slice %7 {offsets = [0, 56], sizes = [8, 8], strides = [1, 1]} : vector<8x96xf32> to vector<8x8xf32>
    %62 = tpu.transpose %61, [1, 0] : vector<8x8xf32> -> vector<8x8xf32>
    %63 = arith.truncf %62 : vector<8x8xf32> to vector<8x8xbf16>
    %c0_43 = arith.constant 0 : index
    %c3_44 = arith.constant 3 : index
    %c0_45 = arith.constant 0 : index
    %c0_46 = arith.constant 0 : index
    %64 = vector.load %arg6[%c0_43, %c3_44, %c0_45, %c0_46] : memref<1x4x8x8xbf16, #tpu.memory_space<vmem>>, vector<1x1x8x8xbf16>
    %65 = vector.shape_cast %64 : vector<1x1x8x8xbf16> to vector<8x8xbf16>
    %66 = vector.shape_cast %63 : vector<8x8xbf16> to vector<1x1x8x8xbf16>
    tpu.vector_store %arg6[%c0_43, %c3_44, %c0_45, %c0_46], %66 {strides = array<i32>} : memref<1x4x8x8xbf16, #tpu.memory_space<vmem>>, vector<1x1x8x8xbf16>,
    %67 = vector.extract_strided_slice %7 {offsets = [0, 88], sizes = [8, 8], strides = [1, 1]} : vector<8x96xf32> to vector<8x8xf32>
    %68 = arith.truncf %67 : vector<8x8xf32> to vector<8x8xbf16>
    %c0_47 = arith.constant 0 : index
    %c3_48 = arith.constant 3 : index
    %c0_49 = arith.constant 0 : index
    %c0_50 = arith.constant 0 : index
    %69 = vector.load %arg7[%c0_47, %c3_48, %c0_49, %c0_50] : memref<1x4x8x8xbf16, #tpu.memory_space<vmem>>, vector<1x1x8x8xbf16>
    %70 = vector.shape_cast %69 : vector<1x1x8x8xbf16> to vector<8x8xbf16>
    %71 = vector.shape_cast %68 : vector<8x8xbf16> to vector<1x1x8x8xbf16>
    tpu.vector_store %arg7[%c0_47, %c3_48, %c0_49, %c0_50], %71 {strides = array<i32>} : memref<1x4x8x8xbf16, #tpu.memory_space<vmem>>, vector<1x1x8x8xbf16>,
    return
  }
  func.func @transform_0(%arg0: i32, %arg1: i32) -> (i32, i32, i32) {
    %c0_i32 = arith.constant 0 : i32
    %c0_i32_0 = arith.constant 0 : i32
    return %arg0, %arg1, %c0_i32 : i32, i32, i32
  }
  func.func @transform_1(%arg0: i32, %arg1: i32) -> (i32, i32) {
    %c0_i32 = arith.constant 0 : i32
    %c0_i32_0 = arith.constant 0 : i32
    %c0_i32_1 = arith.constant 0 : i32
    return %c0_i32, %c0_i32_0 : i32, i32
  }
  func.func @transform_2(%arg0: i32, %arg1: i32) -> (i32, i32) {
    %c0_i32 = arith.constant 0 : i32
    %c0_i32_0 = arith.constant 0 : i32
    %c0_i32_1 = arith.constant 0 : i32
    return %c0_i32, %c0_i32_0 : i32, i32
  }
  func.func @transform_3(%arg0: i32, %arg1: i32) -> (i32, i32, i32, i32) {
    %c0_i32 = arith.constant 0 : i32
    %c0_i32_0 = arith.constant 0 : i32
    %c0_i32_1 = arith.constant 0 : i32
    return %arg0, %c0_i32, %arg1, %c0_i32_0 : i32, i32, i32, i32
  }
  func.func @transform_4(%arg0: i32, %arg1: i32) -> (i32, i32, i32, i32) {
    %c0_i32 = arith.constant 0 : i32
    %c0_i32_0 = arith.constant 0 : i32
    %c0_i32_1 = arith.constant 0 : i32
    return %arg0, %c0_i32, %c0_i32_0, %arg1 : i32, i32, i32, i32
  }
  func.func @transform_5(%arg0: i32, %arg1: i32) -> (i32, i32, i32, i32) {
    %c0_i32 = arith.constant 0 : i32
    %c0_i32_0 = arith.constant 0 : i32
    %c0_i32_1 = arith.constant 0 : i32
    return %arg0, %c0_i32, %arg1, %c0_i32_0 : i32, i32, i32, i32
  }
}

</mosaic_0001>

<llo_original>
// kernel: tpu_custom_call.1
$region0: #{tpu_custom_call.1}
  #allocation0 [shape = 'u32[]', space=smem, size = 0x4, offset = 0x4, fixed_abs, tag = 'smem constant byte address 0x4 - core index']
  #allocation1 [shape = 'u32[144,128]{1,0:T(1,128)}', space=vmem, size = 0x12000, scoped, tag = 'internal scratch']
  %s0 = inlined_call_operand.hbm [shape: f32[2,8,32], index: 0, kind: input, shape index: {}]
  %s1 = inlined_call_operand.hbm [shape: bf16[32,96], index: 1, kind: input, shape index: {}]
  %s2 = inlined_call_operand.vmem [shape: f32[1,96], index: 2, kind: input, shape index: {}]
  %s3 = inlined_call_operand.hbm [shape: bf16[2,4,8,8], index: 3, kind: output, shape index: {0}]
  %s4 = inlined_call_operand.hbm [shape: bf16[2,4,8,8], index: 4, kind: output, shape index: {1}]
  %s5 = inlined_call_operand.hbm [shape: bf16[2,4,8,8], index: 5, kind: output, shape index: {2}]
  %6 = xla_tuple %s3, %s4, %s5
  %s7 = sld [smem:[#allocation0]]
  $region69: #{tpu_custom_call.1} parent=0
    _
  %s9 = ssub.s32 1, %s7
  %s10 = scalar_select 0, %s9, %s7
  $region1: #{tpu_custom_call.1} parent=0
    #allocation2 [shape = 'u8[8192]{0}', space=vmem, size = 0x2000, scoped, tag = 'input window, operand 0']
    #allocation3 [shape = 's32[2]{0}', space=sflag, size = 0x8, scoped, tag = 'scoped memory for tpu_custom_call.1']
    #allocation4 [shape = 's32[2]{0}', space=sflag, size = 0x8, scoped, tag = 'scoped memory for tpu_custom_call.1']
    #allocation5 [shape = 'u8[8192]{0}', space=vmem, size = 0x2000, scoped, tag = 'input window, operand 1, single buffered']
    #allocation6 [shape = 's32[1]{0}', space=sflag, size = 0x4, scoped, tag = 'scoped memory for tpu_custom_call.1']
    #allocation7 [shape = 'u8[16384]{0}', space=vmem, size = 0x4000, scoped, tag = 'output window, operand 0']
    #allocation8 [shape = 'u8[16384]{0}', space=vmem, size = 0x4000, scoped, tag = 'output window, operand 1']
    #allocation9 [shape = 's32[2]{0}', space=sflag, size = 0x8, scoped, tag = 'scoped memory for tpu_custom_call.1']
    #allocation10 [shape = 'u8[16384]{0}', space=vmem, size = 0x4000, scoped, tag = 'output window, operand 2']
    %11 = vsyncpa [#allocation3], 0
    %s12 = scalar_lea.sflag [#allocation3], 1
    %13 = vsyncpa %s12, 0
    %14 = vsyncpa [#allocation6], 0
    %15 = vsyncpa [#allocation4], 0
    %s16 = scalar_lea.sflag [#allocation4], 1
    %17 = vsyncpa %s16, 0
    %18 = vsyncpa [#allocation9], 0
    %s19 = scalar_lea.sflag [#allocation9], 1
    %20 = vsyncpa %s19, 0
    loop: start=0, step=1, limit=4
    $region2: #{tpu_custom_call.1} parent=1 // loop_pre_header
      _
    $region3: #{tpu_custom_call.1} parent=1 // loop_header
      %s22 = sphi 0, %s26
      %p23 = scmp.ge.s32.totalorder %s22, 4
      %s29 = sphi 0, %s41
      %s30 = sphi 0, %s37
      %s31 = sphi 0, %s29
      %s32 = sphi 0, %s30
      %s33 = sphi 0, %s31
      %s34 = sphi 0, %s32
      %s46 = sphi 0, %s48
      %s49 = sphi 0, %s46
      %s50 = sphi 0, %s49
      %s66 = sphi 0, %s50
      %s70 = sphi 0, %s70
      %s72 = sphi 0, %s70
      %s73 = sphi 0, %s72
      %s87 = sphi 0, %s73
      %s91 = sphi 0, %s91
      %s93 = sphi 0, %s91
      %s94 = sphi 0, %s93
      %s108 = sphi 0, %s94
      %s116 = sphi 0, %s118
      %s119 = sphi 0, %s116
      %s120 = sphi 0, %s119
      %s136 = sphi 0, %s120
      %s144 = sphi 0, %s146
      %s147 = sphi 0, %s144
      %s148 = sphi 0, %s147
      %s164 = sphi 0, %s148
      %s172 = sphi 0, %s174
      %s175 = sphi 0, %s172
      %s176 = sphi 0, %s175
      %s192 = sphi 0, %s176
    $region4: #{tpu_custom_call.1} parent=1 // loop_header_branch
      %25 = sbr.rel (%p23) target = $region8
    $region5: #{tpu_custom_call.1} parent=1 // loop_body
      %s27 = ssub.s32 %s22, 1
      %s28 = ssub.s32 %s22, 2
      %s35 = sadd.s32 1, %s30
      %p36 = scmp.ge.s32.totalorder %s35, 1
      %s37 = scalar_select %p36, 0, %s35
      %s38 = sadd.s32 1, %s29
      %s39 = scalar_select %p36, %s38, %s29
      %p40 = scmp.ge.s32.totalorder %s39, 2
      %s41 = scalar_select %p40, 0, %s39
      %s42 = ssub.s32 %s29, %s41
      %s43 = ssub.s32 %s30, %s37
      %s44 = sor.u32 %s42, %s43
      %p45 = scmp.eq.s32.totalorder %s44, 0
      %s47 = sadd.s32 %s46, 1
      %s48 = scalar_select %p45, %s46, %s47
      %p51 = pneg %p45
      %p52 = scmp.eq.s32.totalorder %s22, 1
      %p53 = por %p51, %p52
      %p54 = scmp.ne.s32.totalorder %s46, %s49
      %p55 = scmp.eq.s32.totalorder %s22, 0
      %p56 = por %p54, %p55
      %p57 = scmp.ne.s32.totalorder %s46, %s49
      %p58 = scmp.eq.s32.totalorder %s27, 1
      %p59 = por %p57, %p58
      %p60 = scmp.ne.s32.totalorder %s49, %s50
      %p61 = scmp.eq.s32.totalorder %s27, 0
      %p62 = por %p60, %p61
      %p63 = scmp.ne.s32.totalorder %s49, %s50
      %p64 = scmp.eq.s32.totalorder %s28, 1
      %p65 = por %p63, %p64
      %p67 = scmp.ne.s32.totalorder %s50, %s66
      %p68 = scmp.eq.s32.totalorder %s28, 0
      %p69 = por %p67, %p68
      %s71 = sadd.s32 %s70, 1
      %p74 = scmp.eq.s32.totalorder %s22, 1
      %p75 = scmp.ne.s32.totalorder %s70, %s72
      %p76 = scmp.eq.s32.totalorder %s22, 0
      %p77 = por %p75, %p76
      %p78 = scmp.ne.s32.totalorder %s70, %s72
      %p79 = scmp.eq.s32.totalorder %s27, 1
      %p80 = por %p78, %p79
      %p81 = scmp.ne.s32.totalorder %s72, %s73
      %p82 = scmp.eq.s32.totalorder %s27, 0
      %p83 = por %p81, %p82
      %p84 = scmp.ne.s32.totalorder %s72, %s73
      %p85 = scmp.eq.s32.totalorder %s28, 1
      %p86 = por %p84, %p85
      %p88 = scmp.ne.s32.totalorder %s73, %s87
      %p89 = scmp.eq.s32.totalorder %s28, 0
      %p90 = por %p88, %p89
      %s92 = sadd.s32 %s91, 1
      %p95 = scmp.eq.s32.totalorder %s22, 1
      %p96 = scmp.ne.s32.totalorder %s91, %s93
      %p97 = scmp.eq.s32.totalorder %s22, 0
      %p98 = por %p96, %p97
      %p99 = scmp.ne.s32.totalorder %s91, %s93
      %p100 = scmp.eq.s32.totalorder %s27, 1
      %p101 = por %p99, %p100
      %p102 = scmp.ne.s32.totalorder %s93, %s94
      %p103 = scmp.eq.s32.totalorder %s27, 0
      %p104 = por %p102, %p103
      %p105 = scmp.ne.s32.totalorder %s93, %s94
      %p106 = scmp.eq.s32.totalorder %s28, 1
      %p107 = por %p105, %p106
      %p109 = scmp.ne.s32.totalorder %s94, %s108
      %p110 = scmp.eq.s32.totalorder %s28, 0
      %p111 = por %p109, %p110
      %s112 = ssub.s32 %s29, %s41
      %s113 = ssub.s32 %s30, %s37
      %s114 = sor.u32 %s112, %s113
      %p115 = scmp.eq.s32.totalorder %s114, 0
      %s117 = sadd.s32 %s116, 1
      %s118 = scalar_select %p115, %s116, %s117
      %p121 = pneg %p115
      %p122 = scmp.eq.s32.totalorder %s22, 1
      %p123 = por %p121, %p122
      %p124 = scmp.ne.s32.totalorder %s116, %s119
      %p125 = scmp.eq.s32.totalorder %s22, 0
      %p126 = por %p124, %p125
      %p127 = scmp.ne.s32.totalorder %s116, %s119
      %p128 = scmp.eq.s32.totalorder %s27, 1
      %p129 = por %p127, %p128
      %p130 = scmp.ne.s32.totalorder %s119, %s120
      %p131 = scmp.eq.s32.totalorder %s27, 0
      %p132 = por %p130, %p131
      %p133 = scmp.ne.s32.totalorder %s119, %s120
      %p134 = scmp.eq.s32.totalorder %s28, 1
      %p135 = por %p133, %p134
      %p137 = scmp.ne.s32.totalorder %s120, %s136
      %p138 = scmp.eq.s32.totalorder %s28, 0
      %p139 = por %p137, %p138
      %s140 = ssub.s32 %s29, %s41
      %s141 = ssub.s32 %s30, %s37
      %s142 = sor.u32 %s140, %s141
      %p143 = scmp.eq.s32.totalorder %s142, 0
      %s145 = sadd.s32 %s144, 1
      %s146 = scalar_select %p143, %s144, %s145
      %p149 = pneg %p143
      %p150 = scmp.eq.s32.totalorder %s22, 1
      %p151 = por %p149, %p150
      %p152 = scmp.ne.s32.totalorder %s144, %s147
      %p153 = scmp.eq.s32.totalorder %s22, 0
      %p154 = por %p152, %p153
      %p155 = scmp.ne.s32.totalorder %s144, %s147
      %p156 = scmp.eq.s32.totalorder %s27, 1
      %p157 = por %p155, %p156
      %p158 = scmp.ne.s32.totalorder %s147, %s148
      %p159 = scmp.eq.s32.totalorder %s27, 0
      %p160 = por %p158, %p159
      %p161 = scmp.ne.s32.totalorder %s147, %s148
      %p162 = scmp.eq.s32.totalorder %s28, 1
      %p163 = por %p161, %p162
      %p165 = scmp.ne.s32.totalorder %s148, %s164
      %p166 = scmp.eq.s32.totalorder %s28, 0
      %p167 = por %p165, %p166
      %s168 = ssub.s32 %s29, %s41
      %s169 = ssub.s32 %s30, %s37
      %s170 = sor.u32 %s168, %s169
      %p171 = scmp.eq.s32.totalorder %s170, 0
      %s173 = sadd.s32 %s172, 1
      %s174 = scalar_select %p171, %s172, %s173
      %p177 = pneg %p171
      %p178 = scmp.eq.s32.totalorder %s22, 1
      %p179 = por %p177, %p178
      %p180 = scmp.ne.s32.totalorder %s172, %s175
      %p181 = scmp.eq.s32.totalorder %s22, 0
      %p182 = por %p180, %p181
      %p183 = scmp.ne.s32.totalorder %s172, %s175
      %p184 = scmp.eq.s32.totalorder %s27, 1
      %p185 = por %p183, %p184
      %p186 = scmp.ne.s32.totalorder %s175, %s176
      %p187 = scmp.eq.s32.totalorder %s27, 0
      %p188 = por %p186, %p187
      %p189 = scmp.ne.s32.totalorder %s175, %s176
      %p190 = scmp.eq.s32.totalorder %s28, 1
      %p191 = por %p189, %p190
      %p193 = scmp.ne.s32.totalorder %s176, %s192
      %p194 = scmp.eq.s32.totalorder %s28, 0
      %p195 = por %p193, %p194
      %p196 = scmp.le.s32.totalorder 1, %s22
      %p197 = scmp.lt.s32.totalorder %s22, 3
      %p198 = pnand %p196, %p197
      %p199 = pneg %p198
      // Predicated region
      $region9: #{tpu_custom_call.1} parent=5 // pred_check
        _
      $region10: #{tpu_custom_call.1} parent=5 // pred_check_branch
        %201 = sbr.rel (%p198) target = $region12
      $region11: #{tpu_custom_call.1} parent=5 // pred_region
        %s202 = ssub.s32 %s22, 1
        // Predicated region
        $region13: #{tpu_custom_call.1} parent=11 // pred_check
          %p203 = pneg %p83
        $region14: #{tpu_custom_call.1} parent=11 // pred_check_branch
          %205 = sbr.rel (%p203) target = $region16
        $region15: #{tpu_custom_call.1} parent=11 // pred_region
          %s207 = ssub.s32 256, 256
          %208 = vsyncadd [#allocation6], %s207
          %s209 = sshll.u32 [#allocation5], 4
          %s210 = int_to_ptr.vmem [resolvable:$true] %s209
          %215 = dma.hbm_to_vmem [thread:$0]  %s1, 256, %s210, [#allocation6], 64, 64, 4
        $region16: #{tpu_custom_call.1} parent=11 // pred_fallthru
          _
        // Predicated region
        $region17: #{tpu_custom_call.1} parent=11 // pred_check
          %p216 = pneg %p104
        $region18: #{tpu_custom_call.1} parent=11 // pred_check_branch
          %218 = sbr.rel (%p216) target = $region20
        $region19: #{tpu_custom_call.1} parent=11 // pred_region
          _
        $region20: #{tpu_custom_call.1} parent=11 // pred_fallthru
          _
      $region12: #{tpu_custom_call.1} parent=5 // pred_fallthru
        _
      %p219 = scmp.lt.s32.totalorder %s22, 2
      // Predicated region
      $region21: #{tpu_custom_call.1} parent=5 // pred_check
        %p220 = pneg %p219
      $region22: #{tpu_custom_call.1} parent=5 // pred_check_branch
        %222 = sbr.rel (%p220) target = $region24
      $region23: #{tpu_custom_call.1} parent=5 // pred_region
        // Predicated region
        $region25: #{tpu_custom_call.1} parent=23 // pred_check
          %p223 = pneg %p56
        $region26: #{tpu_custom_call.1} parent=23 // pred_check_branch
          %225 = sbr.rel (%p223) target = $region28
        $region27: #{tpu_custom_call.1} parent=23 // pred_region
          %s226 = sand.u32 %s46, 1
          %s227 = scalar_lea.sflag [#allocation3], %s226
          %s228 = sand.u32 %s46, 1
          %s229 = smul.addr %s228, 8
          %s230 = scalar_lea.vmem [#allocation2], %s229
          %s232 = ssub.s32 128, 128
          %233 = vsyncadd %s227, %s232
          %s234 = sadd.s32 %s30, %s29
          %s235 = smul.addr %s234, 128
          %s236 = scalar_lea.hbm %s0, %s235
          %s238 = sshll.u32 %s230, 4
          %s239 = int_to_ptr.vmem [resolvable:$true] %s238
          %241 = dma.hbm_to_vmem [thread:$0]  %s236, 128, %s239, %s227
        $region28: #{tpu_custom_call.1} parent=23 // pred_fallthru
          _
      $region24: #{tpu_custom_call.1} parent=5 // pred_fallthru
        _
      %p242 = scmp.le.s32.totalorder 1, %s22
      %p243 = scmp.lt.s32.totalorder %s22, 3
      %p244 = pnand %p242, %p243
      %p245 = pneg %p244
      // Predicated region
      $region29: #{tpu_custom_call.1} parent=5 // pred_check
        _
      $region30: #{tpu_custom_call.1} parent=5 // pred_check_branch
        %247 = sbr.rel (%p244) target = $region32
      $region31: #{tpu_custom_call.1} parent=5 // pred_region
        %s248 = ssub.s32 %s22, 1
        %s249 = sand.u32 %s49, 1
        %s250 = scalar_lea.sflag [#allocation3], %s249
        %s251 = sand.u32 %s49, 1
        %s252 = smul.addr %s251, 8
        %s253 = scalar_lea.vmem [#allocation2], %s252
        // Predicated region
        $region33: #{tpu_custom_call.1} parent=31 // pred_check
          %p254 = pneg %p62
        $region34: #{tpu_custom_call.1} parent=31 // pred_check_branch
          %256 = sbr.rel (%p254) target = $region36
        $region35: #{tpu_custom_call.1} parent=31 // pred_region
          %257 = dma.done %s250, 128
        $region36: #{tpu_custom_call.1} parent=31 // pred_fallthru
          _
        // Predicated region
        $region37: #{tpu_custom_call.1} parent=31 // pred_check
          %p258 = pneg %p83
        $region38: #{tpu_custom_call.1} parent=31 // pred_check_branch
          %260 = sbr.rel (%p258) target = $region40
        $region39: #{tpu_custom_call.1} parent=31 // pred_region
          %261 = dma.done [#allocation6], 256
        $region40: #{tpu_custom_call.1} parent=31 // pred_fallthru
          _
        %s262 = sand.u32 %s49, 1
        %s263 = scalar_lea.sflag [#allocation3], %s262
        %s264 = sand.u32 %s49, 1
        %s265 = smul.addr %s264, 8
        %s266 = scalar_lea.vmem [#allocation2], %s265
        %p267 = pneg %p62
        %p268 = pneg %p59
        %p269 = pneg %p83
        %p270 = pneg %p80
        %p271 = pneg %p104
        %p272 = pneg %p101
        %p273 = pneg %p132
        %p274 = pneg %p129
        %s275 = sand.u32 %s119, 1
        %s276 = scalar_lea.sflag [#allocation4], %s275
        %s277 = sand.u32 %s119, 1
        %s278 = smul.addr %s277, 16
        %s279 = scalar_lea.vmem [#allocation7], %s278
        %p280 = pneg %p160
        %p281 = pneg %p157
        %s282 = sand.u32 %s27, 1
        %s283 = scalar_lea.sflag [#allocation9], %s282
        %s284 = sand.u32 %s147, 1
        %s285 = smul.addr %s284, 16
        %s286 = scalar_lea.vmem [#allocation8], %s285
        %p287 = pneg %p188
        %p288 = pneg %p185
        %s289 = sand.u32 %s27, 1
        %s290 = scalar_lea.sflag [#allocation9], %s289
        %s291 = sand.u32 %s175, 1
        %s292 = smul.addr %s291, 16
        %s293 = scalar_lea.vmem [#allocation10], %s292
        %v295 = vld [vmem:[%s253] sm:$0xff]
        %v296 = vpack.c.bf16 %v295, %v295
        %v297 = vld [vmem:[#allocation5] sm:$0xf]
        %v298 = vld [vmem:[#allocation5 + $0x4] sm:$0xf]
        %v299 = vld [vmem:[#allocation5 + $0x8] sm:$0xf]
        %v300 = vld [vmem:[#allocation5 + $0xc] sm:$0xf]
        %v301 = vld [vmem:[%s2] sm:$0x1]
        %v303 = vlaneseq
        %v304 = vshrl.u32 %v303, 7
        %v305 = vsub.s32 0, %v304
        %v306 = vrot.slane %v301, %v305
        %v312 = vunpack.c.l.b16 %v297
        %v313 = vunpack.c.l.b16 %v298
        %v314 = vunpack.c.l.b16 %v299
        %v315 = vunpack.c.l.b16 %v300
        %v316 = vpack.c.b16 %v313, %v312
        %v317 = vpack.c.b16 %v315, %v314
        %vm320 = vcmask 261120
        %v322 = vsel %vm320, %v296, 0
        %324 = vmatprep.subr.bf16.mxu0 0
        %325 = vmatpush1.bf16.msra.mxu0 %v316
        %326 = vmatprep.subr.bf16.mxu0 0
        %327 = vmatpush1.bf16.msra.mxu0 %v317
        %328 = vmatprep.subr.bf16.mxu0 0
        %329 = vmatpush1.bf16.msra.mxu0 0
        %330 = vmatprep.subr.bf16.mxu0 0
        %331 = vmatpush1.bf16.msra.mxu0 0
        %332 = vmatprep.subr.bf16.mxu0 0
        %333 = vmatpush1.bf16.msra.mxu0 0
        %334 = vmatprep.subr.bf16.mxu0 0
        %335 = vmatpush1.bf16.msra.mxu0 0
        %336 = vmatprep.subr.bf16.mxu0 0
        %337 = vmatpush1.bf16.msra.mxu0 0
        %338 = vmatprep.subr.bf16.mxu0 0
        %339 = vmatpush1.bf16.msra.mxu0 0
        %340 = vmatprep.subr.bf16.mxu0 0
        %341 = vmatpush1.bf16.msra.mxu0 0
        %342 = vmatprep.subr.bf16.mxu0 0
        %343 = vmatpush1.bf16.msra.mxu0 0
        %344 = vmatprep.subr.bf16.mxu0 0
        %345 = vmatpush1.bf16.msra.mxu0 0
        %346 = vmatprep.subr.bf16.mxu0 0
        %347 = vmatpush1.bf16.msra.mxu0 0
        %348 = vmatprep.subr.bf16.mxu0 0
        %349 = vmatpush1.bf16.msra.mxu0 0
        %350 = vmatprep.subr.bf16.mxu0 0
        %351 = vmatpush1.bf16.msra.mxu0 0
        %352 = vmatprep.subr.bf16.mxu0 0
        %353 = vmatpush1.bf16.msra.mxu0 0
        %354 = vmatprep.subr.bf16.mxu0 0
        %355 = vmatpush1.bf16.msra.mxu0 0
        %356 = vmatprep.mubr.bf16.mxu0 0
        %357 = vmatmul.mubr.bf16.gmra.mrb[0].mxu0 %v322
        %v358 = vpop.f32.mrb[0].mxu0
        %v359 = vadd.f32 %v306, %v358
        %v360 = vpop.f32.mrb[0].mxu0
        %v361 = vpop.f32.mrb[0].mxu0
        %v362 = vpop.f32.mrb[0].mxu0
        %363 = vdwg.mxu0
        %v364 = vpack.c.bf16 %v359, %v359
        %vm365 = vcmask 60416
        %366 = vst.msk [vmem:[%s279] sm:$0xf] %vm365, %v364
        %368 = vrot.lane.b32.xlu0 %v359, 96
        %v369 = vpop.permute.xlu0 %368
        %371 = vxpose.xlu0.b32.start [1/16] %v369, 128
        %372 = vxpose.xlu0.b32.cont [2/16] 0.0, 128
        %373 = vxpose.xlu0.b32.cont [3/16] 0.0, 128
        %374 = vxpose.xlu0.b32.cont [4/16] 0.0, 128
        %375 = vxpose.xlu0.b32.cont [5/16] 0.0, 128
        %376 = vxpose.xlu0.b32.cont [6/16] 0.0, 128
        %377 = vxpose.xlu0.b32.cont [7/16] 0.0, 128
        %378 = vxpose.xlu0.b32.cont [8/16] 0.0, 128
        %379 = vxpose.xlu0.b32.cont [9/16] 0.0, 128
        %380 = vxpose.xlu0.b32.cont [10/16] 0.0, 128
        %381 = vxpose.xlu0.b32.cont [11/16] 0.0, 128
        %382 = vxpose.xlu0.b32.cont [12/16] 0.0, 128
        %383 = vxpose.xlu0.b32.cont [13/16] 0.0, 128
        %384 = vxpose.xlu0.b32.cont [14/16] 0.0, 128
        %385 = vxpose.xlu0.b32.cont [15/16] 0.0, 128
        %386 = vxpose.xlu0.b32.end [16/16] 0.0, 128
        %v387 = vpop.trf.xlu0
        %v388 = vpop.trf.xlu0
        %v389 = vpop.trf.xlu0
        %v390 = vpop.trf.xlu0
        %v391 = vpop.trf.xlu0
        %v392 = vpop.trf.xlu0
        %v393 = vpop.trf.xlu0
        %v394 = vpop.trf.xlu0
        %v395 = vpop.trf.xlu0
        %v396 = vpop.trf.xlu0
        %v397 = vpop.trf.xlu0
        %v398 = vpop.trf.xlu0
        %v399 = vpop.trf.xlu0
        %v400 = vpop.trf.xlu0
        %v401 = vpop.trf.xlu0
        %v402 = vpop.trf.xlu0
        %v403 = vpack.c.bf16 %v387, %v387
        %404 = vst.msk [vmem:[%s286] sm:$0xf] %vm365, %v403
        %v406 = vunpack.c.l.b16 %v364
        %v407 = vpack.c.b16 %v406, %v406
        %408 = vrot.lane.b32.xlu0 %v407, 64
        %v409 = vpop.permute.xlu0 %408
        %411 = vst.msk [vmem:[%s293] sm:$0xf] %vm365, %v409
        %412 = vrot.lane.b32.xlu0 %v407, 120
        %v413 = vpop.permute.xlu0 %412
        %s415 = scalar_lea.vmem %s279, 4 [#allocation7]
        %416 = vst.msk [vmem:[%s415] sm:$0xf] %vm365, %v413
        %417 = vrot.lane.b32.xlu0 %v359, 88
        %v418 = vpop.permute.xlu0 %417
        %420 = vxpose.xlu0.b32.start [1/16] %v418, 128
        %421 = vxpose.xlu0.b32.cont [2/16] 0.0, 128
        %422 = vxpose.xlu0.b32.cont [3/16] 0.0, 128
        %423 = vxpose.xlu0.b32.cont [4/16] 0.0, 128
        %424 = vxpose.xlu0.b32.cont [5/16] 0.0, 128
        %425 = vxpose.xlu0.b32.cont [6/16] 0.0, 128
        %426 = vxpose.xlu0.b32.cont [7/16] 0.0, 128
        %427 = vxpose.xlu0.b32.cont [8/16] 0.0, 128
        %428 = vxpose.xlu0.b32.cont [9/16] 0.0, 128
        %429 = vxpose.xlu0.b32.cont [10/16] 0.0, 128
        %430 = vxpose.xlu0.b32.cont [11/16] 0.0, 128
        %431 = vxpose.xlu0.b32.cont [12/16] 0.0, 128
        %432 = vxpose.xlu0.b32.cont [13/16] 0.0, 128
        %433 = vxpose.xlu0.b32.cont [14/16] 0.0, 128
        %434 = vxpose.xlu0.b32.cont [15/16] 0.0, 128
        %435 = vxpose.xlu0.b32.end [16/16] 0.0, 128
        %v436 = vpop.trf.xlu0
        %v437 = vpop.trf.xlu0
        %v438 = vpop.trf.xlu0
        %v439 = vpop.trf.xlu0
        %v440 = vpop.trf.xlu0
        %v441 = vpop.trf.xlu0
        %v442 = vpop.trf.xlu0
        %v443 = vpop.trf.xlu0
        %v444 = vpop.trf.xlu0
        %v445 = vpop.trf.xlu0
        %v446 = vpop.trf.xlu0
        %v447 = vpop.trf.xlu0
        %v448 = vpop.trf.xlu0
        %v449 = vpop.trf.xlu0
        %v450 = vpop.trf.xlu0
        %v451 = vpop.trf.xlu0
        %v452 = vpack.c.bf16 %v436, %v436
        %s453 = scalar_lea.vmem %s286, 4 [#allocation8]
        %454 = vst.msk [vmem:[%s453] sm:$0xf] %vm365, %v452
        %455 = vrot.lane.b32.xlu0 %v407, 56
        %v456 = vpop.permute.xlu0 %455
        %s458 = scalar_lea.vmem %s293, 4 [#allocation10]
        %459 = vst.msk [vmem:[%s458] sm:$0xf] %vm365, %v456
        %460 = vrot.lane.b32.xlu0 %v407, 112
        %v461 = vpop.permute.xlu0 %460
        %s463 = scalar_lea.vmem %s279, 8 [#allocation7]
        %464 = vst.msk [vmem:[%s463] sm:$0xf] %vm365, %v461
        %465 = vrot.lane.b32.xlu0 %v359, 80
        %v466 = vpop.permute.xlu0 %465
        %468 = vxpose.xlu0.b32.start [1/16] %v466, 128
        %469 = vxpose.xlu0.b32.cont [2/16] 0.0, 128
        %470 = vxpose.xlu0.b32.cont [3/16] 0.0, 128
        %471 = vxpose.xlu0.b32.cont [4/16] 0.0, 128
        %472 = vxpose.xlu0.b32.cont [5/16] 0.0, 128
        %473 = vxpose.xlu0.b32.cont [6/16] 0.0, 128
        %474 = vxpose.xlu0.b32.cont [7/16] 0.0, 128
        %475 = vxpose.xlu0.b32.cont [8/16] 0.0, 128
        %476 = vxpose.xlu0.b32.cont [9/16] 0.0, 128
        %477 = vxpose.xlu0.b32.cont [10/16] 0.0, 128
        %478 = vxpose.xlu0.b32.cont [11/16] 0.0, 128
        %479 = vxpose.xlu0.b32.cont [12/16] 0.0, 128
        %480 = vxpose.xlu0.b32.cont [13/16] 0.0, 128
        %481 = vxpose.xlu0.b32.cont [14/16] 0.0, 128
        %482 = vxpose.xlu0.b32.cont [15/16] 0.0, 128
        %483 = vxpose.xlu0.b32.end [16/16] 0.0, 128
        %v484 = vpop.trf.xlu0
        %v485 = vpop.trf.xlu0
        %v486 = vpop.trf.xlu0
        %v487 = vpop.trf.xlu0
        %v488 = vpop.trf.xlu0
        %v489 = vpop.trf.xlu0
        %v490 = vpop.trf.xlu0
        %v491 = vpop.trf.xlu0
        %v492 = vpop.trf.xlu0
        %v493 = vpop.trf.xlu0
        %v494 = vpop.trf.xlu0
        %v495 = vpop.trf.xlu0
        %v496 = vpop.trf.xlu0
        %v497 = vpop.trf.xlu0
        %v498 = vpop.trf.xlu0
        %v499 = vpop.trf.xlu0
        %v500 = vpack.c.bf16 %v484, %v484
        %s501 = scalar_lea.vmem %s286, 8 [#allocation8]
        %502 = vst.msk [vmem:[%s501] sm:$0xf] %vm365, %v500
        %503 = vrot.lane.b32.xlu0 %v407, 48
        %v504 = vpop.permute.xlu0 %503
        %s506 = scalar_lea.vmem %s293, 8 [#allocation10]
        %507 = vst.msk [vmem:[%s506] sm:$0xf] %vm365, %v504
        %508 = vrot.lane.b32.xlu0 %v407, 104
        %v509 = vpop.permute.xlu0 %508
        %s511 = scalar_lea.vmem %s279, 12 [#allocation7]
        %512 = vst.msk [vmem:[%s511] sm:$0xf] %vm365, %v509
        %513 = vrot.lane.b32.xlu0 %v359, 72
        %v514 = vpop.permute.xlu0 %513
        %516 = vxpose.xlu0.b32.start [1/16] %v514, 128
        %517 = vxpose.xlu0.b32.cont [2/16] 0.0, 128
        %518 = vxpose.xlu0.b32.cont [3/16] 0.0, 128
        %519 = vxpose.xlu0.b32.cont [4/16] 0.0, 128
        %520 = vxpose.xlu0.b32.cont [5/16] 0.0, 128
        %521 = vxpose.xlu0.b32.cont [6/16] 0.0, 128
        %522 = vxpose.xlu0.b32.cont [7/16] 0.0, 128
        %523 = vxpose.xlu0.b32.cont [8/16] 0.0, 128
        %524 = vxpose.xlu0.b32.cont [9/16] 0.0, 128
        %525 = vxpose.xlu0.b32.cont [10/16] 0.0, 128
        %526 = vxpose.xlu0.b32.cont [11/16] 0.0, 128
        %527 = vxpose.xlu0.b32.cont [12/16] 0.0, 128
        %528 = vxpose.xlu0.b32.cont [13/16] 0.0, 128
        %529 = vxpose.xlu0.b32.cont [14/16] 0.0, 128
        %530 = vxpose.xlu0.b32.cont [15/16] 0.0, 128
        %531 = vxpose.xlu0.b32.end [16/16] 0.0, 128
        %v532 = vpop.trf.xlu0
        %v533 = vpop.trf.xlu0
        %v534 = vpop.trf.xlu0
        %v535 = vpop.trf.xlu0
        %v536 = vpop.trf.xlu0
        %v537 = vpop.trf.xlu0
        %v538 = vpop.trf.xlu0
        %v539 = vpop.trf.xlu0
        %v540 = vpop.trf.xlu0
        %v541 = vpop.trf.xlu0
        %v542 = vpop.trf.xlu0
        %v543 = vpop.trf.xlu0
        %v544 = vpop.trf.xlu0
        %v545 = vpop.trf.xlu0
        %v546 = vpop.trf.xlu0
        %v547 = vpop.trf.xlu0
        %v548 = vpack.c.bf16 %v532, %v532
        %s549 = scalar_lea.vmem %s286, 12 [#allocation8]
        %550 = vst.msk [vmem:[%s549] sm:$0xf] %vm365, %v548
        %551 = vrot.lane.b32.xlu0 %v407, 40
        %v552 = vpop.permute.xlu0 %551
        %s554 = scalar_lea.vmem %s293, 12 [#allocation10]
        %555 = vst.msk [vmem:[%s554] sm:$0xf] %vm365, %v552
        %s556 = sand.u32 %s119, 1
        %s557 = scalar_lea.sflag [#allocation4], %s556
        %s558 = sand.u32 %s119, 1
        %s559 = smul.addr %s558, 16
        %s560 = scalar_lea.vmem [#allocation7], %s559
        %s561 = sand.u32 %s27, 1
        %s562 = scalar_lea.sflag [#allocation9], %s561
        %s563 = sand.u32 %s147, 1
        %s564 = smul.addr %s563, 16
        %s565 = scalar_lea.vmem [#allocation8], %s564
        %s566 = sand.u32 %s27, 1
        %s567 = scalar_lea.sflag [#allocation9], %s566
        %s568 = sand.u32 %s175, 1
        %s569 = smul.addr %s568, 16
        %s570 = scalar_lea.vmem [#allocation10], %s569
        // Predicated region
        $region41: #{tpu_custom_call.1} parent=31 // pred_check
          %p571 = pneg %p129
        $region42: #{tpu_custom_call.1} parent=31 // pred_check_branch
          %573 = sbr.rel (%p571) target = $region44
        $region43: #{tpu_custom_call.1} parent=31 // pred_region
          %s575 = ssub.s32 256, 256
          %576 = vsyncadd %s557, %s575
          %s577 = smul.addr %s31, 4
          %s578 = sadd.s32 %s32, %s577
          %s579 = smul.addr %s578, 64
          %s580 = scalar_lea.hbm %s3, %s579
          %s581 = sshll.u32 %s560, 4
          %s582 = int_to_ptr.vmem [resolvable:$true] %s581
          %587 = dma.vmem_to_hbm [thread:$0]  %s582, 256, %s580, %s557, 64, 64, 4
        $region44: #{tpu_custom_call.1} parent=31 // pred_fallthru
          _
        // Predicated region
        $region45: #{tpu_custom_call.1} parent=31 // pred_check
          %p588 = pneg %p157
        $region46: #{tpu_custom_call.1} parent=31 // pred_check_branch
          %590 = sbr.rel (%p588) target = $region48
        $region47: #{tpu_custom_call.1} parent=31 // pred_region
          %s592 = ssub.s32 256, 256
          %593 = vsyncadd %s562, %s592
          %s594 = smul.addr %s31, 4
          %s595 = sadd.s32 %s32, %s594
          %s596 = smul.addr %s595, 64
          %s597 = scalar_lea.hbm %s4, %s596
          %s598 = sshll.u32 %s565, 4
          %s599 = int_to_ptr.vmem [resolvable:$true] %s598
          %604 = dma.vmem_to_hbm [thread:$0]  %s599, 256, %s597, %s562, 64, 64, 4
        $region48: #{tpu_custom_call.1} parent=31 // pred_fallthru
          _
        // Predicated region
        $region49: #{tpu_custom_call.1} parent=31 // pred_check
          %p605 = pneg %p185
        $region50: #{tpu_custom_call.1} parent=31 // pred_check_branch
          %607 = sbr.rel (%p605) target = $region52
        $region51: #{tpu_custom_call.1} parent=31 // pred_region
          %s609 = ssub.s32 256, 256
          %610 = vsyncadd %s567, %s609
          %s611 = smul.addr %s31, 4
          %s612 = sadd.s32 %s32, %s611
          %s613 = smul.addr %s612, 64
          %s614 = scalar_lea.hbm %s5, %s613
          %s615 = sshll.u32 %s570, 4
          %s616 = int_to_ptr.vmem [resolvable:$true] %s615
          %621 = dma.vmem_to_hbm [thread:$0]  %s616, 256, %s614, %s567, 64, 64, 4
        $region52: #{tpu_custom_call.1} parent=31 // pred_fallthru
          _
      $region32: #{tpu_custom_call.1} parent=5 // pred_fallthru
        _
      %p622 = scmp.le.s32.totalorder 2, %s22
      // Predicated region
      $region53: #{tpu_custom_call.1} parent=5 // pred_check
        %p623 = pneg %p622
      $region54: #{tpu_custom_call.1} parent=5 // pred_check_branch
        %625 = sbr.rel (%p623) target = $region56
      $region55: #{tpu_custom_call.1} parent=5 // pred_region
        %s626 = ssub.s32 %s22, 2
        // Predicated region
        $region57: #{tpu_custom_call.1} parent=55 // pred_check
          %p627 = pneg %p135
        $region58: #{tpu_custom_call.1} parent=55 // pred_check_branch
          %629 = sbr.rel (%p627) target = $region60
        $region59: #{tpu_custom_call.1} parent=55 // pred_region
          %s630 = sand.u32 %s120, 1
          %s631 = scalar_lea.sflag [#allocation4], %s630
          %s632 = sand.u32 %s120, 1
          %s633 = smul.addr %s632, 16
          %s634 = scalar_lea.vmem [#allocation7], %s633
          %635 = dma.done %s631, 256
        $region60: #{tpu_custom_call.1} parent=55 // pred_fallthru
          _
        // Predicated region
        $region61: #{tpu_custom_call.1} parent=55 // pred_check
          %p636 = pneg %p163
        $region62: #{tpu_custom_call.1} parent=55 // pred_check_branch
          %638 = sbr.rel (%p636) target = $region64
        $region63: #{tpu_custom_call.1} parent=55 // pred_region
          %s639 = sand.u32 %s28, 1
          %s640 = scalar_lea.sflag [#allocation9], %s639
          %s641 = sand.u32 %s148, 1
          %s642 = smul.addr %s641, 16
          %s643 = scalar_lea.vmem [#allocation8], %s642
          %644 = dma.done %s640, 256
        $region64: #{tpu_custom_call.1} parent=55 // pred_fallthru
          _
        // Predicated region
        $region65: #{tpu_custom_call.1} parent=55 // pred_check
          %p645 = pneg %p191
        $region66: #{tpu_custom_call.1} parent=55 // pred_check_branch
          %647 = sbr.rel (%p645) target = $region68
        $region67: #{tpu_custom_call.1} parent=55 // pred_region
          %s648 = sand.u32 %s28, 1
          %s649 = scalar_lea.sflag [#allocation9], %s648
          %s650 = sand.u32 %s176, 1
          %s651 = smul.addr %s650, 16
          %s652 = scalar_lea.vmem [#allocation10], %s651
          %653 = dma.done %s649, 256
        $region68: #{tpu_custom_call.1} parent=55 // pred_fallthru
          _
      $region56: #{tpu_custom_call.1} parent=5 // pred_fallthru
        _
    $region6: #{tpu_custom_call.1} parent=1 // loop_footer
      %s26 = sadd.s32 1, %s22
    $region7: #{tpu_custom_call.1} parent=1 // loop_footer_branch
      %21 = sbr.rel target = $region3
    $region8: #{tpu_custom_call.1} parent=1 // loop_exit
      _
    %654 = vsyncpa [#allocation3], 1
    %s655 = scalar_lea.sflag [#allocation3], 1
    %656 = vsyncpa %s655, 1
    %657 = vsyncpa [#allocation6], 1
    %658 = vsyncpa [#allocation4], 1
    %s659 = scalar_lea.sflag [#allocation4], 1
    %660 = vsyncpa %s659, 1
    %661 = vsyncpa [#allocation9], 1
    %s662 = scalar_lea.sflag [#allocation9], 1
    %663 = vsyncpa %s662, 1

</llo_original>
